<compile_context>
chip_gen: v7x
topology: tpu7x:2x2x1
jax: 0.10.0
libtpu: 0.0.40
codegen_flags: <defaults>
</compile_context>

<pallas_src>
import math
from functools import partial

import jax
import jax.numpy as jnp
from jax.experimental import pallas as pl
from jax.experimental.pallas import tpu as pltpu

_OUT_PAD = 128   # lane-dense width of the prediction-head / readout path
_SUB = 8         # sublane-dense rows of the per-sample readout block


def _round_up(x, m):
    return ((x + m - 1) // m) * m


# --------------------------- fused forward kernel ---------------------------

def _bgcn_fused_kernel(adj_ref, h0_ref, cw_ref, cb_ref, pw_ref, pb_ref,
                       out_ref, h_scr):
    """One BBB weight sample's full BGCN forward (grid axis = sample).

    adj_ref : (N, N)        bf16 dense D^-1/2 (A+I) D^-1/2 (constant across grid)
    h0_ref  : (N, F)        f32 input features, zero-padded to F lanes (constant)
    cw_ref  : (L, F, F)     bf16 conv weights (zero-padded, [F_in, F_out])
    cb_ref  : (L, 1, F)     f32 conv biases
    pw_ref  : (L, F, 128)   f32 prediction-head weights (out_dim padded to 128)
    pb_ref  : (L, 1, 128)   f32 prediction-head biases
    out_ref : (8, 128)      f32 readout, row 0 holds the result (dense store)
    h_scr   : VMEM (N, F)   f32 running node representation (never leaves VMEM)
    """
    n_layers = cw_ref.shape[0]
    n_nodes = adj_ref.shape[0]

    acc = None
    for i in range(n_layers):            # small static L -> fully unrolled
        # Layer 0 consumes h0 directly (no copy into scratch).
        h = h0_ref[...] if i == 0 else h_scr[...]          # (N, F) f32
        # TODO(synk): nn.Dropout before layers i>0 is identity in eval mode;
        # training-mode random masking is not implemented here.

        # --- prediction head (applied to pre-conv h, as in the reference), ---
        # --- with the node-mean pushed through the linear head (exact).     ---
        s = jnp.sum(h, axis=0, keepdims=True)              # (1, F) XLU reduce
        head = (jnp.dot(s, pw_ref[i], preferred_element_type=jnp.float32)
                + float(n_nodes) * pb_ref[i])              # (1, 128)
        acc = head if i == 0 else acc + head

        # --- graph conv: relu((A_hat @ h) @ W + b) ---------------------------
        # The last conv layer's output is never read by the readout (the
        # reference also discards it), so skip that matmul entirely.
        if i + 1 < n_layers:
            h_bf = h.astype(jnp.bfloat16)                  # bf16 MXU inputs
            agg = jnp.dot(adj_ref[...], h_bf,              # f32 accumulation
                          preferred_element_type=jnp.float32)
            z = (jnp.dot(agg.astype(jnp.bfloat16), cw_ref[i],
                         preferred_element_type=jnp.float32)
                 + cb_ref[i])                              # f32 elementwise
            h_scr[...] = jnp.maximum(z, 0.0)

    inv = 1.0 / float(n_layers * n_nodes)
    # Lane- and sublane-dense store; row 0 carries the readout.
    out_ref[...] = jnp.broadcast_to(acc * inv, (_SUB, _OUT_PAD))


def _bgcn_pallas(adj, h0, cw, cb, pw, pb):
    """adj (N,N) bf16, h0 (N,F) f32, cw (S,L,F,F) bf16, cb (S,L,1,F) f32,
    pw (S,L,F,128) f32, pb (S,L,1,128) f32 -> (S, 8, 128) f32 readout."""
    n_samples, n_layers, f, _ = cw.shape
    n = adj.shape[0]

    # Advisory cost estimate (conv matmuls dominate; head path is a matvec).
    flops = n_samples * n_layers * 2 * (n * n * f + n * f * f + f * _OUT_PAD)
    bytes_accessed = (adj.size * 2 + h0.size * 4 + cw.size * 2 + cb.size * 4
                      + pw.size * 4 + pb.size * 4
                      + n_samples * _SUB * _OUT_PAD * 4)

    # Explicit scoped-VMEM budget: resident adj/h0/H-scratch plus
    # double-buffered per-sample weight blocks, 2x headroom, capped at v7x's
    # 64 MiB physical VMEM (v5e default scoped limit is only 16 MiB).
    per_sample_w = ((cw.size // n_samples) * 2 + (cb.size // n_samples) * 4
                    + (pw.size // n_samples) * 4 + (pb.size // n_samples) * 4)
    resident = adj.size * 2 + h0.size * 4 + n * f * 4
    needed = resident + 2 * per_sample_w + 2 * _SUB * _OUT_PAD * 4
    vmem_limit = int(min(64 * 2 ** 20, max(16 * 2 ** 20, 2 * needed + (2 << 20))))

    return pl.pallas_call(
        _bgcn_fused_kernel,
        out_shape=jax.ShapeDtypeStruct((n_samples, _SUB, _OUT_PAD), jnp.float32),
        grid=(n_samples,),
        in_specs=[
            pl.BlockSpec((n, n), lambda s: (0, 0)),     # adj: fetched once, reused
            pl.BlockSpec((n, f), lambda s: (0, 0)),     # h0: fetched once, reused
            pl.BlockSpec((None, n_layers, f, f), lambda s: (s, 0, 0, 0)),
            pl.BlockSpec((None, n_layers, 1, f), lambda s: (s, 0, 0, 0)),
            pl.BlockSpec((None, n_layers, f, _OUT_PAD), lambda s: (s, 0, 0, 0)),
            pl.BlockSpec((None, n_layers, 1, _OUT_PAD), lambda s: (s, 0, 0, 0)),
        ],
        out_specs=pl.BlockSpec((None, _SUB, _OUT_PAD), lambda s: (s, 0, 0)),
        scratch_shapes=[pltpu.VMEM((n, f), jnp.float32)],   # H resident per sample
        compiler_params=pltpu.CompilerParams(
            dimension_semantics=("parallel",),   # sample axis -> both TCs on v7x
            vmem_limit_bytes=vmem_limit),
        cost_estimate=pl.CostEstimate(flops=flops, transcendentals=0,
                                      bytes_accessed=bytes_accessed),
        # TODO(synk): for N beyond VMEM capacity, stream bf16 adj k-tiles per
        # layer with pltpu.emit_pipeline (H kept resident) instead of forcing
        # full adjacency residency.
    )(adj, h0, cw, cb, pw, pb)


# ------------------------- BBB parameter machinery --------------------------

def _make_masks(dims, pad_in, pad_out):
    rows = jnp.arange(pad_in)[:, None]
    cols = jnp.arange(pad_out)[None, :]
    w_mask = jnp.stack([((rows < fi) & (cols < fo)).astype(jnp.float32)
                        for fi, fo in dims])                      # (L, Fi, Fo)
    b_mask = jnp.stack([(jnp.arange(pad_out)[None, :] < fo).astype(jnp.float32)
                        for _, fo in dims])                       # (L, 1, Fo)
    return w_mask, b_mask


def init_bbb_stack(key, dims, pad_in, pad_out,
                   posterior_mu_init=(0.0, 0.1), posterior_rho_init=(-5.0, 0.1)):
    """Stacked, pre-padded BBB posterior params for a list of (f_in, f_out)."""
    n_layers = len(dims)
    w_mask, b_mask = _make_masks(dims, pad_in, pad_out)
    k1, k2, k3, k4 = jax.random.split(key, 4)
    w_mu = (posterior_mu_init[0] + posterior_mu_init[1]
            * jax.random.normal(k1, (n_layers, pad_in, pad_out), jnp.float32)) * w_mask
    w_rho = posterior_rho_init[0] + posterior_rho_init[1] * jax.random.normal(
        k2, (n_layers, pad_in, pad_out), jnp.float32)
    b_mu = (posterior_mu_init[0] + posterior_mu_init[1]
            * jax.random.normal(k3, (n_layers, 1, pad_out), jnp.float32)) * b_mask
    b_rho = posterior_rho_init[0] + posterior_rho_init[1] * jax.random.normal(
        k4, (n_layers, 1, pad_out), jnp.float32)
    return dict(w_mu=w_mu, w_rho=w_rho, b_mu=b_mu, b_rho=b_rho,
                w_mask=w_mask, b_mask=b_mask)


def sample_bbb_stack(key, p, n_samples):
    """Reparameterization trick, S samples at once; padded slots exactly zero."""
    kw, kb = jax.random.split(key)
    w_sigma = jax.nn.softplus(p["w_rho"])
    b_sigma = jax.nn.softplus(p["b_rho"])
    eps_w = jax.random.normal(kw, (n_samples,) + p["w_mu"].shape, jnp.float32)
    eps_b = jax.random.normal(kb, (n_samples,) + p["b_mu"].shape, jnp.float32)
    w = (p["w_mu"] + w_sigma * eps_w) * p["w_mask"]      # (S, L, Fi, Fo)
    b = (p["b_mu"] + b_sigma * eps_b) * p["b_mask"]      # (S, L, 1,  Fo)
    return w, b


def kl_loss_stack(p, prior_mu, prior_sigma):
    def _kl(mu, rho, mask):
        sigma = jax.nn.softplus(rho)
        t = (jnp.log(prior_sigma / sigma)
             + (sigma ** 2 + (mu - prior_mu) ** 2) / (2.0 * prior_sigma ** 2)
             - 0.5)
        return jnp.sum(t * mask)          # mask: padded slots contribute 0
    return (_kl(p["w_mu"], p["w_rho"], p["w_mask"])
            + _kl(p["b_mu"], p["b_rho"], p["b_mask"]))


# ------------------------------ BGCN forward --------------------------------

@partial(jax.jit, static_argnames=("n_samples", "out_dim"))
def bgcn_forward(key, adj_hat, h0p, conv_params, pred_params,
                 prior_mu, prior_sigma, *, n_samples, out_dim):
    """S independent BGCN forwards (one fresh BBB weight sample each).

    Returns (out, kl): out[s] matches one forward() of the PyTorch module,
    kl is the conv-layer KL (sample-independent, depends only on mu/rho).
    """
    kc, kp = jax.random.split(key)
    cw, cb = sample_bbb_stack(kc, conv_params, n_samples)
    pw, pb = sample_bbb_stack(kp, pred_params, n_samples)

    out_pad = _bgcn_pallas(adj_hat.astype(jnp.bfloat16),
                           h0p.astype(jnp.float32),
                           cw.astype(jnp.bfloat16), cb, pw, pb)

    kl = kl_loss_stack(conv_params, prior_mu, prior_sigma)   # conv layers only
    return out_pad[:, 0, :out_dim], kl


if __name__ == "__main__":
    key = jax.random.PRNGKey(0)

    # small shapes consistent with the module
    N = 16                 # nodes in a single graph
    in_dim = 8
    hidden_dim = 32
    out_dim = 8
    n_layers = 3
    n_samples = 2          # Monte-Carlo weight samples (grid "parallel" axis)
    prior_mu, prior_sigma = 0.0, 0.1
    f_conv = _round_up(max(in_dim, hidden_dim), 128)   # lane-dense conv width

    k_graph, k_feat, k_conv, k_pred, k_sample = jax.random.split(key, 5)

    # deterministic random undirected graph with self loops -> dense A_hat
    logits = jax.random.uniform(k_graph, (N, N))
    a = ((logits + logits.T) > 1.2).astype(jnp.float32)
    a = jnp.minimum(a + jnp.eye(N, dtype=jnp.float32), 1.0)
    deg = a.sum(axis=1)
    dinv = 1.0 / jnp.sqrt(deg)
    adj_hat = dinv[:, None] * a * dinv[None, :]          # D^-1/2 (A+I) D^-1/2

    h0 = jax.random.normal(k_feat, (N, in_dim), jnp.float32)
    h0p = jnp.pad(h0, ((0, 0), (0, f_conv - in_dim)))    # zero-pad to F lanes

    # pre-padded, stacked BBB posterior parameters (no pad/stack per forward)
    conv_dims = [(in_dim, hidden_dim)] + [(hidden_dim, hidden_dim)] * (n_layers - 1)
    pred_dims = [(in_dim, out_dim)] + [(hidden_dim, out_dim)] * (n_layers - 1)
    conv_params = init_bbb_stack(k_conv, conv_dims, f_conv, f_conv)
    pred_params = init_bbb_stack(k_pred, pred_dims, f_conv, _OUT_PAD)

    out, kl = bgcn_forward(k_sample, adj_hat, h0p, conv_params, pred_params,
                           prior_mu, prior_sigma,
                           n_samples=n_samples, out_dim=out_dim)
    jax.block_until_ready(out)
    jax.block_until_ready(kl)

    assert out.shape == (n_samples, out_dim)
    assert out.dtype == jnp.float32
    assert bool(jnp.isfinite(out).all()) and bool(jnp.isfinite(kl))
    print("KERNEL_OK")
</pallas_src>

<mosaic_0001>
module attributes {stable_mosaic.version = 11 : i64} {
  func.func @_bgcn_fused_kernel(%arg0: i32, %arg1: memref<16x16xbf16, #tpu.memory_space<vmem>>, %arg2: memref<16x128xf32, #tpu.memory_space<vmem>>, %arg3: memref<1x3x128x128xbf16, #tpu.memory_space<vmem>>, %arg4: memref<1x3x1x128xf32, #tpu.memory_space<vmem>>, %arg5: memref<1x3x128x128xf32, #tpu.memory_space<vmem>>, %arg6: memref<1x3x1x128xf32, #tpu.memory_space<vmem>>, %arg7: memref<1x8x128xf32, #tpu.memory_space<vmem>>, %arg8: memref<16x128xf32, #tpu.memory_space<vmem>>) attributes {dimension_semantics = [#tpu.dimension_semantics<parallel>], iteration_bounds = array<i64: 2>, scalar_prefetch = 0 : i64, scratch_operands = 1 : i64, tpu.core_type = #tpu.core_type<tc>, window_params = [{pipeline_mode = #tpu.pipeline_mode<synchronous>, transform_indices = @transform_0, window_bounds = array<i64: 16, 16>}, {pipeline_mode = #tpu.pipeline_mode<synchronous>, transform_indices = @transform_1, window_bounds = array<i64: 16, 128>}, {transform_indices = @transform_2, window_bounds = array<i64: 1, 3, 128, 128>}, {transform_indices = @transform_3, window_bounds = array<i64: 1, 3, 1, 128>}, {transform_indices = @transform_4, window_bounds = array<i64: 1, 3, 128, 128>}, {transform_indices = @transform_5, window_bounds = array<i64: 1, 3, 1, 128>}, {transform_indices = @transform_6, window_bounds = array<i64: 1, 8, 128>}]} {
    %c0 = arith.constant 0 : index
    %c0_0 = arith.constant 0 : index
    %0 = vector.load %arg2[%c0, %c0_0] : memref<16x128xf32, #tpu.memory_space<vmem>>, vector<16x128xf32>
    %cst = arith.constant dense<0.000000e+00> : vector<128xf32>
    %1 = vector.multi_reduction <add>, %0, %cst [0] : vector<16x128xf32> to vector<128xf32>
    %2 = vector.shape_cast %1 : vector<128xf32> to vector<1x128xf32>
    %c0_1 = arith.constant 0 : index
    %c0_2 = arith.constant 0 : index
    %c0_3 = arith.constant 0 : index
    %c0_4 = arith.constant 0 : index
    %3 = vector.load %arg5[%c0_1, %c0_2, %c0_3, %c0_4] : memref<1x3x128x128xf32, #tpu.memory_space<vmem>>, vector<1x1x128x128xf32>
    %4 = vector.shape_cast %3 : vector<1x1x128x128xf32> to vector<128x128xf32>
    %cst_5 = arith.constant dense<0.000000e+00> : vector<1x128xf32>
    %5 = tpu.matmul %2, %4, %cst_5 {dimension_numbers = #tpu.dot_dimension_numbers<[1], [0], [0], [1], [0, 0, 1, 1], [], []>} : vector<1x128xf32>, vector<128x128xf32>, vector<1x128xf32> -> vector<1x128xf32>
    %c0_6 = arith.constant 0 : index
    %c0_7 = arith.constant 0 : index
    %c0_8 = arith.constant 0 : index
    %c0_9 = arith.constant 0 : index
    %6 = vector.load %arg6[%c0_6, %c0_7, %c0_8, %c0_9] : memref<1x3x1x128xf32, #tpu.memory_space<vmem>>, vector<1x1x1x128xf32>
    %7 = vector.shape_cast %6 : vector<1x1x1x128xf32> to vector<1x128xf32>
    %cst_10 = arith.constant 1.600000e+01 : f32
    %8 = vector.broadcast %cst_10 : f32 to vector<1x128xf32>
    %9 = arith.mulf %8, %7 : vector<1x128xf32>
    %10 = arith.addf %5, %9 : vector<1x128xf32>
    %11 = arith.truncf %0 : vector<16x128xf32> to vector<16x128xbf16>
    %c0_11 = arith.constant 0 : index
    %c0_12 = arith.constant 0 : index
    %12 = vector.load %arg1[%c0_11, %c0_12] : memref<16x16xbf16, #tpu.memory_space<vmem>>, vector<16x16xbf16>
    %cst_13 = arith.constant dense<0.000000e+00> : vector<16x128xf32>
    %13 = tpu.matmul %12, %11, %cst_13 {dimension_numbers = #tpu.dot_dimension_numbers<[1], [0], [0], [1], [0, 0, 1, 1], [], []>} : vector<16x16xbf16>, vector<16x128xbf16>, vector<16x128xf32> -> vector<16x128xf32>
    %14 = arith.truncf %13 : vector<16x128xf32> to vector<16x128xbf16>
    %c0_14 = arith.constant 0 : index
    %c0_15 = arith.constant 0 : index
    %c0_16 = arith.constant 0 : index
    %c0_17 = arith.constant 0 : index
    %15 = vector.load %arg3[%c0_14, %c0_15, %c0_16, %c0_17] : memref<1x3x128x128xbf16, #tpu.memory_space<vmem>>, vector<1x1x128x128xbf16>
    %16 = vector.shape_cast %15 : vector<1x1x128x128xbf16> to vector<128x128xbf16>
    %cst_18 = arith.constant dense<0.000000e+00> : vector<16x128xf32>
    %17 = tpu.matmul %14, %16, %cst_18 {dimension_numbers = #tpu.dot_dimension_numbers<[1], [0], [0], [1], [0, 0, 1, 1], [], []>} : vector<16x128xbf16>, vector<128x128xbf16>, vector<16x128xf32> -> vector<16x128xf32>
    %c0_19 = arith.constant 0 : index
    %c0_20 = arith.constant 0 : index
    %c0_21 = arith.constant 0 : index
    %c0_22 = arith.constant 0 : index
    %18 = vector.load %arg4[%c0_19, %c0_20, %c0_21, %c0_22] : memref<1x3x1x128xf32, #tpu.memory_space<vmem>>, vector<1x1x1x128xf32>
    %19 = vector.shape_cast %18 : vector<1x1x1x128xf32> to vector<1x128xf32>
    %20 = vector.broadcast %19 : vector<1x128xf32> to vector<16x128xf32>
    %21 = arith.addf %17, %20 : vector<16x128xf32>
    %cst_23 = arith.constant 0.000000e+00 : f32
    %22 = vector.broadcast %cst_23 : f32 to vector<16x128xf32>
    %23 = arith.maximumf %21, %22 : vector<16x128xf32>
    %c0_24 = arith.constant 0 : index
    %c0_25 = arith.constant 0 : index
    %24 = vector.load %arg8[%c0_24, %c0_25] : memref<16x128xf32, #tpu.memory_space<vmem>>, vector<16x128xf32>
    tpu.vector_store %arg8[%c0_24, %c0_25], %23 {strides = array<i32>} : memref<16x128xf32, #tpu.memory_space<vmem>>, vector<16x128xf32>,
    %c0_26 = arith.constant 0 : index
    %c0_27 = arith.constant 0 : index
    %25 = vector.load %arg8[%c0_26, %c0_27] : memref<16x128xf32, #tpu.memory_space<vmem>>, vector<16x128xf32>
    %cst_28 = arith.constant dense<0.000000e+00> : vector<128xf32>
    %26 = vector.multi_reduction <add>, %25, %cst_28 [0] : vector<16x128xf32> to vector<128xf32>
    %27 = vector.shape_cast %26 : vector<128xf32> to vector<1x128xf32>
    %c0_29 = arith.constant 0 : index
    %c1 = arith.constant 1 : index
    %c0_30 = arith.constant 0 : index
    %c0_31 = arith.constant 0 : index
    %28 = vector.load %arg5[%c0_29, %c1, %c0_30, %c0_31] : memref<1x3x128x128xf32, #tpu.memory_space<vmem>>, vector<1x1x128x128xf32>
    %29 = vector.shape_cast %28 : vector<1x1x128x128xf32> to vector<128x128xf32>
    %cst_32 = arith.constant dense<0.000000e+00> : vector<1x128xf32>
    %30 = tpu.matmul %27, %29, %cst_32 {dimension_numbers = #tpu.dot_dimension_numbers<[1], [0], [0], [1], [0, 0, 1, 1], [], []>} : vector<1x128xf32>, vector<128x128xf32>, vector<1x128xf32> -> vector<1x128xf32>
    %c0_33 = arith.constant 0 : index
    %c1_34 = arith.constant 1 : index
    %c0_35 = arith.constant 0 : index
    %c0_36 = arith.constant 0 : index
    %31 = vector.load %arg6[%c0_33, %c1_34, %c0_35, %c0_36] : memref<1x3x1x128xf32, #tpu.memory_space<vmem>>, vector<1x1x1x128xf32>
    %32 = vector.shape_cast %31 : vector<1x1x1x128xf32> to vector<1x128xf32>
    %cst_37 = arith.constant 1.600000e+01 : f32
    %33 = vector.broadcast %cst_37 : f32 to vector<1x128xf32>
    %34 = arith.mulf %33, %32 : vector<1x128xf32>
    %35 = arith.addf %30, %34 : vector<1x128xf32>
    %36 = arith.addf %10, %35 : vector<1x128xf32>
    %37 = arith.truncf %25 : vector<16x128xf32> to vector<16x128xbf16>
    %c0_38 = arith.constant 0 : index
    %c0_39 = arith.constant 0 : index
    %38 = vector.load %arg1[%c0_38, %c0_39] : memref<16x16xbf16, #tpu.memory_space<vmem>>, vector<16x16xbf16>
    %cst_40 = arith.constant dense<0.000000e+00> : vector<16x128xf32>
    %39 = tpu.matmul %38, %37, %cst_40 {dimension_numbers = #tpu.dot_dimension_numbers<[1], [0], [0], [1], [0, 0, 1, 1], [], []>} : vector<16x16xbf16>, vector<16x128xbf16>, vector<16x128xf32> -> vector<16x128xf32>
    %40 = arith.truncf %39 : vector<16x128xf32> to vector<16x128xbf16>
    %c0_41 = arith.constant 0 : index
    %c1_42 = arith.constant 1 : index
    %c0_43 = arith.constant 0 : index
    %c0_44 = arith.constant 0 : index
    %41 = vector.load %arg3[%c0_41, %c1_42, %c0_43, %c0_44] : memref<1x3x128x128xbf16, #tpu.memory_space<vmem>>, vector<1x1x128x128xbf16>
    %42 = vector.shape_cast %41 : vector<1x1x128x128xbf16> to vector<128x128xbf16>
    %cst_45 = arith.constant dense<0.000000e+00> : vector<16x128xf32>
    %43 = tpu.matmul %40, %42, %cst_45 {dimension_numbers = #tpu.dot_dimension_numbers<[1], [0], [0], [1], [0, 0, 1, 1], [], []>} : vector<16x128xbf16>, vector<128x128xbf16>, vector<16x128xf32> -> vector<16x128xf32>
    %c0_46 = arith.constant 0 : index
    %c1_47 = arith.constant 1 : index
    %c0_48 = arith.constant 0 : index
    %c0_49 = arith.constant 0 : index
    %44 = vector.load %arg4[%c0_46, %c1_47, %c0_48, %c0_49] : memref<1x3x1x128xf32, #tpu.memory_space<vmem>>, vector<1x1x1x128xf32>
    %45 = vector.shape_cast %44 : vector<1x1x1x128xf32> to vector<1x128xf32>
    %46 = vector.broadcast %45 : vector<1x128xf32> to vector<16x128xf32>
    %47 = arith.addf %43, %46 : vector<16x128xf32>
    %cst_50 = arith.constant 0.000000e+00 : f32
    %48 = vector.broadcast %cst_50 : f32 to vector<16x128xf32>
    %49 = arith.maximumf %47, %48 : vector<16x128xf32>
    %c0_51 = arith.constant 0 : index
    %c0_52 = arith.constant 0 : index
    %50 = vector.load %arg8[%c0_51, %c0_52] : memref<16x128xf32, #tpu.memory_space<vmem>>, vector<16x128xf32>
    tpu.vector_store %arg8[%c0_51, %c0_52], %49 {strides = array<i32>} : memref<16x128xf32, #tpu.memory_space<vmem>>, vector<16x128xf32>,
    %c0_53 = arith.constant 0 : index
    %c0_54 = arith.constant 0 : index
    %51 = vector.load %arg8[%c0_53, %c0_54] : memref<16x128xf32, #tpu.memory_space<vmem>>, vector<16x128xf32>
    %cst_55 = arith.constant dense<0.000000e+00> : vector<128xf32>
    %52 = vector.multi_reduction <add>, %51, %cst_55 [0] : vector<16x128xf32> to vector<128xf32>
    %53 = vector.shape_cast %52 : vector<128xf32> to vector<1x128xf32>
    %c0_56 = arith.constant 0 : index
    %c2 = arith.constant 2 : index
    %c0_57 = arith.constant 0 : index
    %c0_58 = arith.constant 0 : index
    %54 = vector.load %arg5[%c0_56, %c2, %c0_57, %c0_58] : memref<1x3x128x128xf32, #tpu.memory_space<vmem>>, vector<1x1x128x128xf32>
    %55 = vector.shape_cast %54 : vector<1x1x128x128xf32> to vector<128x128xf32>
    %cst_59 = arith.constant dense<0.000000e+00> : vector<1x128xf32>
    %56 = tpu.matmul %53, %55, %cst_59 {dimension_numbers = #tpu.dot_dimension_numbers<[1], [0], [0], [1], [0, 0, 1, 1], [], []>} : vector<1x128xf32>, vector<128x128xf32>, vector<1x128xf32> -> vector<1x128xf32>
    %c0_60 = arith.constant 0 : index
    %c2_61 = arith.constant 2 : index
    %c0_62 = arith.constant 0 : index
    %c0_63 = arith.constant 0 : index
    %57 = vector.load %arg6[%c0_60, %c2_61, %c0_62, %c0_63] : memref<1x3x1x128xf32, #tpu.memory_space<vmem>>, vector<1x1x1x128xf32>
    %58 = vector.shape_cast %57 : vector<1x1x1x128xf32> to vector<1x128xf32>
    %cst_64 = arith.constant 1.600000e+01 : f32
    %59 = vector.broadcast %cst_64 : f32 to vector<1x128xf32>
    %60 = arith.mulf %59, %58 : vector<1x128xf32>
    %61 = arith.addf %56, %60 : vector<1x128xf32>
    %62 = arith.addf %36, %61 : vector<1x128xf32>
    %cst_65 = arith.constant 0.020833334 : f32
    %63 = vector.broadcast %cst_65 : f32 to vector<1x128xf32>
    %64 = arith.mulf %62, %63 : vector<1x128xf32>
    %65 = vector.shape_cast %64 : vector<1x128xf32> to vector<1x128xf32>
    %66 = vector.broadcast %65 : vector<1x128xf32> to vector<8x128xf32>
    %c0_66 = arith.constant 0 : index
    %c0_67 = arith.constant 0 : index
    %c0_68 = arith.constant 0 : index
    %67 = vector.load %arg7[%c0_66, %c0_67, %c0_68] : memref<1x8x128xf32, #tpu.memory_space<vmem>>, vector<1x8x128xf32>
    %68 = vector.shape_cast %67 : vector<1x8x128xf32> to vector<8x128xf32>
    %69 = vector.shape_cast %66 : vector<8x128xf32> to vector<1x8x128xf32>
    tpu.vector_store %arg7[%c0_66, %c0_67, %c0_68], %69 {strides = array<i32>} : memref<1x8x128xf32, #tpu.memory_space<vmem>>, vector<1x8x128xf32>,
    return
  }
  func.func @transform_0(%arg0: i32) -> (i32, i32) {
    %c0_i32 = arith.constant 0 : i32
    %c0_i32_0 = arith.constant 0 : i32
    %c0_i32_1 = arith.constant 0 : i32
    return %c0_i32, %c0_i32_0 : i32, i32
  }
  func.func @transform_1(%arg0: i32) -> (i32, i32) {
    %c0_i32 = arith.constant 0 : i32
    %c0_i32_0 = arith.constant 0 : i32
    %c0_i32_1 = arith.constant 0 : i32
    return %c0_i32, %c0_i32_0 : i32, i32
  }
  func.func @transform_2(%arg0: i32) -> (i32, i32, i32, i32) {
    %c0_i32 = arith.constant 0 : i32
    %c0_i32_0 = arith.constant 0 : i32
    %c0_i32_1 = arith.constant 0 : i32
    %c0_i32_2 = arith.constant 0 : i32
    return %arg0, %c0_i32, %c0_i32_0, %c0_i32_1 : i32, i32, i32, i32
  }
  func.func @transform_3(%arg0: i32) -> (i32, i32, i32, i32) {
    %c0_i32 = arith.constant 0 : i32
    %c0_i32_0 = arith.constant 0 : i32
    %c0_i32_1 = arith.constant 0 : i32
    %c0_i32_2 = arith.constant 0 : i32
    return %arg0, %c0_i32, %c0_i32_0, %c0_i32_1 : i32, i32, i32, i32
  }
  func.func @transform_4(%arg0: i32) -> (i32, i32, i32, i32) {
    %c0_i32 = arith.constant 0 : i32
    %c0_i32_0 = arith.constant 0 : i32
    %c0_i32_1 = arith.constant 0 : i32
    %c0_i32_2 = arith.constant 0 : i32
    return %arg0, %c0_i32, %c0_i32_0, %c0_i32_1 : i32, i32, i32, i32
  }
  func.func @transform_5(%arg0: i32) -> (i32, i32, i32, i32) {
    %c0_i32 = arith.constant 0 : i32
    %c0_i32_0 = arith.constant 0 : i32
    %c0_i32_1 = arith.constant 0 : i32
    %c0_i32_2 = arith.constant 0 : i32
    return %arg0, %c0_i32, %c0_i32_0, %c0_i32_1 : i32, i32, i32, i32
  }
  func.func @transform_6(%arg0: i32) -> (i32, i32, i32) {
    %c0_i32 = arith.constant 0 : i32
    %c0_i32_0 = arith.constant 0 : i32
    %c0_i32_1 = arith.constant 0 : i32
    return %arg0, %c0_i32, %c0_i32_0 : i32, i32, i32
  }
}

</mosaic_0001>

<llo_original>
// kernel: bgcn_forward.1
$region0: #{bgcn_forward.1}
  #allocation0 [shape = 'u32[]', space=smem, size = 0x4, offset = 0x4, fixed_abs, tag = 'smem constant byte address 0x4 - core index']
  #allocation1 [shape = 'u32[144,128]{1,0:T(1,128)}', space=vmem, size = 0x12000, scoped, tag = 'internal scratch']
  #allocation2 [shape = 'f32[16,128]{1,0:T(8,128)}', space=vmem, size = 0x2000, scoped, tag = 'scratch operand']
  %s0 = inlined_call_operand.vmem [shape: bf16[16,16], index: 0, kind: input, shape index: {}]
  %s1 = inlined_call_operand.vmem [shape: f32[16,128], index: 1, kind: input, shape index: {}]
  %s2 = inlined_call_operand.vmem [shape: bf16[2,3,128,128], index: 2, kind: input, shape index: {}]
  %s3 = inlined_call_operand.vmem [shape: f32[2,3,1,128], index: 3, kind: input, shape index: {}]
  %s4 = inlined_call_operand.vmem [shape: f32[2,3,128,128], index: 4, kind: input, shape index: {}]
  %s5 = inlined_call_operand.vmem [shape: f32[2,3,1,128], index: 5, kind: input, shape index: {}]
  %s6 = inlined_call_operand.vmem [shape: f32[2,8,128], index: 6, kind: output, shape index: {}]
  %s7 = sld [smem:[#allocation0]]
  $region57: #{bgcn_forward.1} parent=0
    _
  %s9 = ssub.s32 1, %s7
  %s10 = scalar_select 0, %s9, %s7
  loop: start=0, step=1, limit=4
  $region2: #{bgcn_forward.1} parent=0 // loop_pre_header
    _
  $region3: #{bgcn_forward.1} parent=0 // loop_header
    %s12 = sphi 0, %s16
    %p13 = scmp.ge.s32.totalorder %s12, 4
    %s20 = sphi 0, %s20
    %s22 = sphi 0, %s20
    %s23 = sphi 0, %s22
    %s37 = sphi 0, %s23
    %s41 = sphi 0, %s41
    %s43 = sphi 0, %s41
    %s44 = sphi 0, %s43
    %s58 = sphi 0, %s44
    %s64 = sphi 0, %s66
    %s67 = sphi 0, %s64
    %s68 = sphi 0, %s67
    %s84 = sphi 0, %s68
    %s90 = sphi 0, %s92
    %s93 = sphi 0, %s90
    %s94 = sphi 0, %s93
    %s110 = sphi 0, %s94
    %s116 = sphi 0, %s118
    %s119 = sphi 0, %s116
    %s120 = sphi 0, %s119
    %s136 = sphi 0, %s120
    %s142 = sphi 0, %s144
    %s145 = sphi 0, %s142
    %s146 = sphi 0, %s145
    %s162 = sphi 0, %s146
    %s168 = sphi 0, %s170
    %s171 = sphi 0, %s168
    %s172 = sphi 0, %s171
    %s188 = sphi 0, %s172
  $region4: #{bgcn_forward.1} parent=0 // loop_header_branch
    %15 = sbr.rel (%p13) target = $region8
  $region5: #{bgcn_forward.1} parent=0 // loop_body
    %s17 = ssub.s32 %s12, 1
    %s18 = ssub.s32 %s12, 2
    %s19 = sadd.s32 %s12, 1
    %s21 = sadd.s32 %s20, 1
    %p24 = scmp.eq.s32.totalorder %s12, 1
    %p25 = scmp.ne.s32.totalorder %s20, %s22
    %p26 = scmp.eq.s32.totalorder %s12, 0
    %p27 = por %p25, %p26
    %p28 = scmp.ne.s32.totalorder %s20, %s22
    %p29 = scmp.eq.s32.totalorder %s17, 1
    %p30 = por %p28, %p29
    %p31 = scmp.ne.s32.totalorder %s22, %s23
    %p32 = scmp.eq.s32.totalorder %s17, 0
    %p33 = por %p31, %p32
    %p34 = scmp.ne.s32.totalorder %s22, %s23
    %p35 = scmp.eq.s32.totalorder %s18, 1
    %p36 = por %p34, %p35
    %p38 = scmp.ne.s32.totalorder %s23, %s37
    %p39 = scmp.eq.s32.totalorder %s18, 0
    %p40 = por %p38, %p39
    %s42 = sadd.s32 %s41, 1
    %p45 = scmp.eq.s32.totalorder %s12, 1
    %p46 = scmp.ne.s32.totalorder %s41, %s43
    %p47 = scmp.eq.s32.totalorder %s12, 0
    %p48 = por %p46, %p47
    %p49 = scmp.ne.s32.totalorder %s41, %s43
    %p50 = scmp.eq.s32.totalorder %s17, 1
    %p51 = por %p49, %p50
    %p52 = scmp.ne.s32.totalorder %s43, %s44
    %p53 = scmp.eq.s32.totalorder %s17, 0
    %p54 = por %p52, %p53
    %p55 = scmp.ne.s32.totalorder %s43, %s44
    %p56 = scmp.eq.s32.totalorder %s18, 1
    %p57 = por %p55, %p56
    %p59 = scmp.ne.s32.totalorder %s44, %s58
    %p60 = scmp.eq.s32.totalorder %s18, 0
    %p61 = por %p59, %p60
    %s62 = ssub.s32 %s12, %s19
    %p63 = scmp.eq.s32.totalorder %s62, 0
    %s65 = sadd.s32 %s64, 1
    %s66 = scalar_select %p63, %s64, %s65
    %p69 = pneg %p63
    %p70 = scmp.eq.s32.totalorder %s12, 1
    %p71 = por %p69, %p70
    %p72 = scmp.ne.s32.totalorder %s64, %s67
    %p73 = scmp.eq.s32.totalorder %s12, 0
    %p74 = por %p72, %p73
    %p75 = scmp.ne.s32.totalorder %s64, %s67
    %p76 = scmp.eq.s32.totalorder %s17, 1
    %p77 = por %p75, %p76
    %p78 = scmp.ne.s32.totalorder %s67, %s68
    %p79 = scmp.eq.s32.totalorder %s17, 0
    %p80 = por %p78, %p79
    %p81 = scmp.ne.s32.totalorder %s67, %s68
    %p82 = scmp.eq.s32.totalorder %s18, 1
    %p83 = por %p81, %p82
    %p85 = scmp.ne.s32.totalorder %s68, %s84
    %p86 = scmp.eq.s32.totalorder %s18, 0
    %p87 = por %p85, %p86
    %s88 = ssub.s32 %s12, %s19
    %p89 = scmp.eq.s32.totalorder %s88, 0
    %s91 = sadd.s32 %s90, 1
    %s92 = scalar_select %p89, %s90, %s91
    %p95 = pneg %p89
    %p96 = scmp.eq.s32.totalorder %s12, 1
    %p97 = por %p95, %p96
    %p98 = scmp.ne.s32.totalorder %s90, %s93
    %p99 = scmp.eq.s32.totalorder %s12, 0
    %p100 = por %p98, %p99
    %p101 = scmp.ne.s32.totalorder %s90, %s93
    %p102 = scmp.eq.s32.totalorder %s17, 1
    %p103 = por %p101, %p102
    %p104 = scmp.ne.s32.totalorder %s93, %s94
    %p105 = scmp.eq.s32.totalorder %s17, 0
    %p106 = por %p104, %p105
    %p107 = scmp.ne.s32.totalorder %s93, %s94
    %p108 = scmp.eq.s32.totalorder %s18, 1
    %p109 = por %p107, %p108
    %p111 = scmp.ne.s32.totalorder %s94, %s110
    %p112 = scmp.eq.s32.totalorder %s18, 0
    %p113 = por %p111, %p112
    %s114 = ssub.s32 %s12, %s19
    %p115 = scmp.eq.s32.totalorder %s114, 0
    %s117 = sadd.s32 %s116, 1
    %s118 = scalar_select %p115, %s116, %s117
    %p121 = pneg %p115
    %p122 = scmp.eq.s32.totalorder %s12, 1
    %p123 = por %p121, %p122
    %p124 = scmp.ne.s32.totalorder %s116, %s119
    %p125 = scmp.eq.s32.totalorder %s12, 0
    %p126 = por %p124, %p125
    %p127 = scmp.ne.s32.totalorder %s116, %s119
    %p128 = scmp.eq.s32.totalorder %s17, 1
    %p129 = por %p127, %p128
    %p130 = scmp.ne.s32.totalorder %s119, %s120
    %p131 = scmp.eq.s32.totalorder %s17, 0
    %p132 = por %p130, %p131
    %p133 = scmp.ne.s32.totalorder %s119, %s120
    %p134 = scmp.eq.s32.totalorder %s18, 1
    %p135 = por %p133, %p134
    %p137 = scmp.ne.s32.totalorder %s120, %s136
    %p138 = scmp.eq.s32.totalorder %s18, 0
    %p139 = por %p137, %p138
    %s140 = ssub.s32 %s12, %s19
    %p141 = scmp.eq.s32.totalorder %s140, 0
    %s143 = sadd.s32 %s142, 1
    %s144 = scalar_select %p141, %s142, %s143
    %p147 = pneg %p141
    %p148 = scmp.eq.s32.totalorder %s12, 1
    %p149 = por %p147, %p148
    %p150 = scmp.ne.s32.totalorder %s142, %s145
    %p151 = scmp.eq.s32.totalorder %s12, 0
    %p152 = por %p150, %p151
    %p153 = scmp.ne.s32.totalorder %s142, %s145
    %p154 = scmp.eq.s32.totalorder %s17, 1
    %p155 = por %p153, %p154
    %p156 = scmp.ne.s32.totalorder %s145, %s146
    %p157 = scmp.eq.s32.totalorder %s17, 0
    %p158 = por %p156, %p157
    %p159 = scmp.ne.s32.totalorder %s145, %s146
    %p160 = scmp.eq.s32.totalorder %s18, 1
    %p161 = por %p159, %p160
    %p163 = scmp.ne.s32.totalorder %s146, %s162
    %p164 = scmp.eq.s32.totalorder %s18, 0
    %p165 = por %p163, %p164
    %s166 = ssub.s32 %s12, %s19
    %p167 = scmp.eq.s32.totalorder %s166, 0
    %s169 = sadd.s32 %s168, 1
    %s170 = scalar_select %p167, %s168, %s169
    %p173 = pneg %p167
    %p174 = scmp.eq.s32.totalorder %s12, 1
    %p175 = por %p173, %p174
    %p176 = scmp.ne.s32.totalorder %s168, %s171
    %p177 = scmp.eq.s32.totalorder %s12, 0
    %p178 = por %p176, %p177
    %p179 = scmp.ne.s32.totalorder %s168, %s171
    %p180 = scmp.eq.s32.totalorder %s17, 1
    %p181 = por %p179, %p180
    %p182 = scmp.ne.s32.totalorder %s171, %s172
    %p183 = scmp.eq.s32.totalorder %s17, 0
    %p184 = por %p182, %p183
    %p185 = scmp.ne.s32.totalorder %s171, %s172
    %p186 = scmp.eq.s32.totalorder %s18, 1
    %p187 = por %p185, %p186
    %p189 = scmp.ne.s32.totalorder %s172, %s188
    %p190 = scmp.eq.s32.totalorder %s18, 0
    %p191 = por %p189, %p190
    %p192 = scmp.le.s32.totalorder 1, %s12
    %p193 = scmp.lt.s32.totalorder %s12, 3
    %p194 = pnand %p192, %p193
    %p195 = pneg %p194
    // Predicated region
    $region9: #{bgcn_forward.1} parent=5 // pred_check
      _
    $region10: #{bgcn_forward.1} parent=5 // pred_check_branch
      %197 = sbr.rel (%p194) target = $region12
    $region11: #{bgcn_forward.1} parent=5 // pred_region
      %s198 = ssub.s32 %s12, 1
      // Predicated region
      $region13: #{bgcn_forward.1} parent=11 // pred_check
        %p199 = pneg %p33
      $region14: #{bgcn_forward.1} parent=11 // pred_check_branch
        %201 = sbr.rel (%p199) target = $region16
      $region15: #{bgcn_forward.1} parent=11 // pred_region
        _
      $region16: #{bgcn_forward.1} parent=11 // pred_fallthru
        _
      // Predicated region
      $region17: #{bgcn_forward.1} parent=11 // pred_check
        %p202 = pneg %p54
      $region18: #{bgcn_forward.1} parent=11 // pred_check_branch
        %204 = sbr.rel (%p202) target = $region20
      $region19: #{bgcn_forward.1} parent=11 // pred_region
        _
      $region20: #{bgcn_forward.1} parent=11 // pred_fallthru
        _
    $region12: #{bgcn_forward.1} parent=5 // pred_fallthru
      _
    %p205 = scmp.lt.s32.totalorder %s12, 2
    // Predicated region
    $region21: #{bgcn_forward.1} parent=5 // pred_check
      %p206 = pneg %p205
    $region22: #{bgcn_forward.1} parent=5 // pred_check_branch
      %208 = sbr.rel (%p206) target = $region24
    $region23: #{bgcn_forward.1} parent=5 // pred_region
      // Predicated region
      $region25: #{bgcn_forward.1} parent=23 // pred_check
        %p209 = pneg %p74
      $region26: #{bgcn_forward.1} parent=23 // pred_check_branch
        %211 = sbr.rel (%p209) target = $region28
      $region27: #{bgcn_forward.1} parent=23 // pred_region
        %p212 = scmp.lt.s32.totalorder %s12, 1
        %s213 = scalar_select %p212, %s12, 1
        %s214 = smul.addr %s213, 48
        %s215 = smul.addr %s214, 4
        %s216 = scalar_lea.vmem %s2, %s215
      $region28: #{bgcn_forward.1} parent=23 // pred_fallthru
        _
      // Predicated region
      $region29: #{bgcn_forward.1} parent=23 // pred_check
        %p217 = pneg %p100
      $region30: #{bgcn_forward.1} parent=23 // pred_check_branch
        %219 = sbr.rel (%p217) target = $region32
      $region31: #{bgcn_forward.1} parent=23 // pred_region
        %p220 = scmp.lt.s32.totalorder %s12, 1
        %s221 = scalar_select %p220, %s12, 1
        %s222 = smul.addr %s221, 3
        %s223 = scalar_lea.vmem %s3, %s222
      $region32: #{bgcn_forward.1} parent=23 // pred_fallthru
        _
      // Predicated region
      $region33: #{bgcn_forward.1} parent=23 // pred_check
        %p224 = pneg %p126
      $region34: #{bgcn_forward.1} parent=23 // pred_check_branch
        %226 = sbr.rel (%p224) target = $region36
      $region35: #{bgcn_forward.1} parent=23 // pred_region
        %p227 = scmp.lt.s32.totalorder %s12, 1
        %s228 = scalar_select %p227, %s12, 1
        %s229 = smul.addr %s228, 48
        %s230 = smul.addr %s229, 8
        %s231 = scalar_lea.vmem %s4, %s230
      $region36: #{bgcn_forward.1} parent=23 // pred_fallthru
        _
      // Predicated region
      $region37: #{bgcn_forward.1} parent=23 // pred_check
        %p232 = pneg %p152
      $region38: #{bgcn_forward.1} parent=23 // pred_check_branch
        %234 = sbr.rel (%p232) target = $region40
      $region39: #{bgcn_forward.1} parent=23 // pred_region
        %p235 = scmp.lt.s32.totalorder %s12, 1
        %s236 = scalar_select %p235, %s12, 1
        %s237 = smul.addr %s236, 3
        %s238 = scalar_lea.vmem %s5, %s237
      $region40: #{bgcn_forward.1} parent=23 // pred_fallthru
        _
    $region24: #{bgcn_forward.1} parent=5 // pred_fallthru
      _
    %p239 = scmp.le.s32.totalorder 1, %s12
    %p240 = scmp.lt.s32.totalorder %s12, 3
    %p241 = pnand %p239, %p240
    %p242 = pneg %p241
    // Predicated region
    $region41: #{bgcn_forward.1} parent=5 // pred_check
      _
    $region42: #{bgcn_forward.1} parent=5 // pred_check_branch
      %244 = sbr.rel (%p241) target = $region44
    $region43: #{bgcn_forward.1} parent=5 // pred_region
      %s245 = ssub.s32 %s12, 1
      %p246 = pneg %p33
      %p247 = pneg %p30
      %p248 = pneg %p54
      %p249 = pneg %p51
      %p250 = scmp.lt.s32.totalorder %s17, 1
      %s251 = scalar_select %p250, %s17, 1
      %s252 = smul.addr %s251, 48
      %s253 = smul.addr %s252, 4
      %s254 = scalar_lea.vmem %s2, %s253
      %p255 = pneg %p80
      %p256 = pneg %p77
      %p257 = scmp.lt.s32.totalorder %s17, 1
      %s258 = scalar_select %p257, %s17, 1
      %s259 = smul.addr %s258, 3
      %s260 = scalar_lea.vmem %s3, %s259
      %p261 = pneg %p106
      %p262 = pneg %p103
      %p263 = scmp.lt.s32.totalorder %s17, 1
      %s264 = scalar_select %p263, %s17, 1
      %s265 = smul.addr %s264, 48
      %s266 = smul.addr %s265, 8
      %s267 = scalar_lea.vmem %s4, %s266
      %p268 = pneg %p132
      %p269 = pneg %p129
      %p270 = scmp.lt.s32.totalorder %s17, 1
      %s271 = scalar_select %p270, %s17, 1
      %s272 = smul.addr %s271, 3
      %s273 = scalar_lea.vmem %s5, %s272
      %p274 = pneg %p158
      %p275 = pneg %p155
      %p276 = pneg %p184
      %p277 = pneg %p181
      %p278 = scmp.lt.s32.totalorder %s17, 1
      %s279 = scalar_select %p278, %s17, 1
      %s280 = smul.addr %s279, 8
      %s281 = scalar_lea.vmem %s6, %s280
      %p282 = scmp.lt.s32.totalorder %s17, 1
      %s283 = scalar_select %p282, %s17, 1
      %s284 = smul.addr %s283, 48
      %s285 = smul.addr %s284, 4
      %s286 = scalar_lea.vmem %s2, %s285
      %p287 = scmp.lt.s32.totalorder %s17, 1
      %s288 = scalar_select %p287, %s17, 1
      %s289 = smul.addr %s288, 3
      %s290 = scalar_lea.vmem %s3, %s289
      %p291 = scmp.lt.s32.totalorder %s17, 1
      %s292 = scalar_select %p291, %s17, 1
      %s293 = smul.addr %s292, 48
      %s294 = smul.addr %s293, 8
      %s295 = scalar_lea.vmem %s4, %s294
      %p296 = scmp.lt.s32.totalorder %s17, 1
      %s297 = scalar_select %p296, %s17, 1
      %s298 = smul.addr %s297, 3
      %s299 = scalar_lea.vmem %s5, %s298
      %p300 = scmp.lt.s32.totalorder %s17, 1
      %s301 = scalar_select %p300, %s17, 1
      %s302 = smul.addr %s301, 8
      %s303 = scalar_lea.vmem %s6, %s302
      %v305 = vld [vmem:[%s1] sm:$0xff]
      %v306 = vld [vmem:[%s1 + $0x8] sm:$0xff]
      %v307 = vadd.f32 %v305, %v306
      %v308 = vrot.slane %v307, 4
      %v309 = vadd.f32 %v307, %v308
      %v310 = vrot.slane %v309, 2
      %v311 = vadd.f32 %v309, %v310
      %v312 = vrot.slane %v311, 1
      %v313 = vadd.f32 %v311, %v312
      %v314 = vld [vmem:[%s295] sm:$0xff]
      %v315 = vld [vmem:[%s295 + $0x8] sm:$0xff]
      %v316 = vld [vmem:[%s295 + $0x10] sm:$0xff]
      %v317 = vld [vmem:[%s295 + $0x18] sm:$0xff]
      %v318 = vld [vmem:[%s295 + $0x20] sm:$0xff]
      %v319 = vld [vmem:[%s295 + $0x28] sm:$0xff]
      %v320 = vld [vmem:[%s295 + $0x30] sm:$0xff]
      %v321 = vld [vmem:[%s295 + $0x38] sm:$0xff]
      %v322 = vld [vmem:[%s295 + $0x40] sm:$0xff]
      %v323 = vld [vmem:[%s295 + $0x48] sm:$0xff]
      %v324 = vld [vmem:[%s295 + $0x50] sm:$0xff]
      %v325 = vld [vmem:[%s295 + $0x58] sm:$0xff]
      %v326 = vld [vmem:[%s295 + $0x60] sm:$0xff]
      %v327 = vld [vmem:[%s295 + $0x68] sm:$0xff]
      %v328 = vld [vmem:[%s295 + $0x70] sm:$0xff]
      %v329 = vld [vmem:[%s295 + $0x78] sm:$0xff]
      %v330 = vld [vmem:[%s299] sm:$0x1]
      %v331 = vmul.f32 %v330, 16.0
      %332 = vmatprep.subr.mxu0 0.0
      %333 = vmatpush1.msra.mxu0 %v314
      %334 = vmatprep.subr.mxu0 0.0
      %335 = vmatpush1.msra.mxu0 %v315
      %336 = vmatprep.subr.mxu0 0.0
      %337 = vmatpush1.msra.mxu0 %v316
      %338 = vmatprep.subr.mxu0 0.0
      %339 = vmatpush1.msra.mxu0 %v317
      %340 = vmatprep.subr.mxu0 0.0
      %341 = vmatpush1.msra.mxu0 %v318
      %342 = vmatprep.subr.mxu0 0.0
      %343 = vmatpush1.msra.mxu0 %v319
      %344 = vmatprep.subr.mxu0 0.0
      %345 = vmatpush1.msra.mxu0 %v320
      %346 = vmatprep.subr.mxu0 0.0
      %347 = vmatpush1.msra.mxu0 %v321
      %348 = vmatprep.subr.mxu0 0.0
      %349 = vmatpush1.msra.mxu0 %v322
      %350 = vmatprep.subr.mxu0 0.0
      %351 = vmatpush1.msra.mxu0 %v323
      %352 = vmatprep.subr.mxu0 0.0
      %353 = vmatpush1.msra.mxu0 %v324
      %354 = vmatprep.subr.mxu0 0.0
      %355 = vmatpush1.msra.mxu0 %v325
      %356 = vmatprep.subr.mxu0 0.0
      %357 = vmatpush1.msra.mxu0 %v326
      %358 = vmatprep.subr.mxu0 0.0
      %359 = vmatpush1.msra.mxu0 %v327
      %360 = vmatprep.subr.mxu0 0.0
      %361 = vmatpush1.msra.mxu0 %v328
      %362 = vmatprep.subr.mxu0 0.0
      %363 = vmatpush1.msra.mxu0 %v329
      %364 = vmatprep.subr.mxu0 0.0
      %365 = vmatpush1.msra.mxu0 0.0
      %366 = vmatprep.subr.mxu0 0.0
      %367 = vmatpush1.msra.mxu0 0.0
      %368 = vmatprep.subr.mxu0 0.0
      %369 = vmatpush1.msra.mxu0 0.0
      %370 = vmatprep.subr.mxu0 0.0
      %371 = vmatpush1.msra.mxu0 0.0
      %372 = vmatprep.subr.mxu0 0.0
      %373 = vmatpush1.msra.mxu0 0.0
      %374 = vmatprep.subr.mxu0 0.0
      %375 = vmatpush1.msra.mxu0 0.0
      %376 = vmatprep.subr.mxu0 0.0
      %377 = vmatpush1.msra.mxu0 0.0
      %378 = vmatprep.subr.mxu0 0.0
      %379 = vmatpush1.msra.mxu0 0.0
      %380 = vmatprep.subr.mxu0 0.0
      %381 = vmatpush1.msra.mxu0 0.0
      %382 = vmatprep.subr.mxu0 0.0
      %383 = vmatpush1.msra.mxu0 0.0
      %384 = vmatprep.subr.mxu0 0.0
      %385 = vmatpush1.msra.mxu0 0.0
      %386 = vmatprep.subr.mxu0 0.0
      %387 = vmatpush1.msra.mxu0 0.0
      %388 = vmatprep.subr.mxu0 0.0
      %389 = vmatpush1.msra.mxu0 0.0
      %390 = vmatprep.subr.mxu0 0.0
      %391 = vmatpush1.msra.mxu0 0.0
      %392 = vmatprep.subr.mxu0 0.0
      %393 = vmatpush1.msra.mxu0 0.0
      %394 = vmatprep.subr.mxu0 0.0
      %395 = vmatpush1.msra.mxu0 0.0
      %396 = vmatprep.mubr.f32.mxu0 0.0
      %397 = vmatmul.mubr.f32.gmra.mrb[0].mxu0 %v313
      %v398 = vpop.f32.mrb[0].mxu0
      %v399 = vadd.f32 %v331, %v398
      %v400 = vpop.f32.mrb[0].mxu0
      %401 = vdwg.mxu0
      %v402 = vpack.c.bf16 %v306, %v305
      %v403 = vld [vmem:[%s0] sm:$0xf]
      %v404 = vld [vmem:[%s0 + $0x4] sm:$0xf]
      %v407 = vunpack.c.l.b16 %v403
      %v408 = vunpack.c.l.b16 %v404
      %v409 = vpack.c.b16 %v408, %v407
      %vm410 = vcmask 130048
      %v412 = vsel %vm410, %v409, 0
      %414 = vmatprep.subr.bf16.mxu0 0
      %415 = vmatpush1.bf16.msra.mxu0 %v402
      %416 = vmatprep.subr.bf16.mxu0 0
      %417 = vmatpush1.bf16.msra.mxu0 0
      %418 = vmatprep.subr.bf16.mxu0 0
      %419 = vmatpush1.bf16.msra.mxu0 0
      %420 = vmatprep.subr.bf16.mxu0 0
      %421 = vmatpush1.bf16.msra.mxu0 0
      %422 = vmatprep.subr.bf16.mxu0 0
      %423 = vmatpush1.bf16.msra.mxu0 0
      %424 = vmatprep.subr.bf16.mxu0 0
      %425 = vmatpush1.bf16.msra.mxu0 0
      %426 = vmatprep.subr.bf16.mxu0 0
      %427 = vmatpush1.bf16.msra.mxu0 0
      %428 = vmatprep.subr.bf16.mxu0 0
      %429 = vmatpush1.bf16.msra.mxu0 0
      %430 = vmatprep.subr.bf16.mxu0 0
      %431 = vmatpush1.bf16.msra.mxu0 0
      %432 = vmatprep.subr.bf16.mxu0 0
      %433 = vmatpush1.bf16.msra.mxu0 0
      %434 = vmatprep.subr.bf16.mxu0 0
      %435 = vmatpush1.bf16.msra.mxu0 0
      %436 = vmatprep.subr.bf16.mxu0 0
      %437 = vmatpush1.bf16.msra.mxu0 0
      %438 = vmatprep.subr.bf16.mxu0 0
      %439 = vmatpush1.bf16.msra.mxu0 0
      %440 = vmatprep.subr.bf16.mxu0 0
      %441 = vmatpush1.bf16.msra.mxu0 0
      %442 = vmatprep.subr.bf16.mxu0 0
      %443 = vmatpush1.bf16.msra.mxu0 0
      %444 = vmatprep.subr.bf16.mxu0 0
      %445 = vmatpush1.bf16.msra.mxu0 0
      %446 = vmatprep.mubr.bf16.mxu0 0
      %447 = vmatmul.mubr.bf16.gmra.mrb[0].mxu0 %v412
      %v448 = vpop.f32.mrb[0].mxu0
      %v449 = vadd.f32 0.0, %v448
      %v450 = vpop.f32.mrb[0].mxu0
      %v451 = vpop.f32.mrb[0].mxu0
      %v452 = vadd.f32 0.0, %v451
      %v453 = vpop.f32.mrb[0].mxu0
      %454 = vdwg.mxu0
      %v455 = vpack.c.bf16 %v452, %v449
      %v456 = vld [vmem:[%s286] sm:$0xf]
      %v457 = vld [vmem:[%s286 + $0x4] sm:$0xf]
      %v458 = vld [vmem:[%s286 + $0x8] sm:$0xf]
      %v459 = vld [vmem:[%s286 + $0xc] sm:$0xf]
      %v460 = vld [vmem:[%s286 + $0x10] sm:$0xf]
      %v461 = vld [vmem:[%s286 + $0x14] sm:$0xf]
      %v462 = vld [vmem:[%s286 + $0x18] sm:$0xf]
      %v463 = vld [vmem:[%s286 + $0x1c] sm:$0xf]
      %v464 = vld [vmem:[%s286 + $0x20] sm:$0xf]
      %v465 = vld [vmem:[%s286 + $0x24] sm:$0xf]
      %v466 = vld [vmem:[%s286 + $0x28] sm:$0xf]
      %v467 = vld [vmem:[%s286 + $0x2c] sm:$0xf]
      %v468 = vld [vmem:[%s286 + $0x30] sm:$0xf]
      %v469 = vld [vmem:[%s286 + $0x34] sm:$0xf]
      %v470 = vld [vmem:[%s286 + $0x38] sm:$0xf]
      %v471 = vld [vmem:[%s286 + $0x3c] sm:$0xf]
      %v472 = vld [vmem:[%s290] sm:$0x1]
      %v474 = vlaneseq
      %v475 = vshrl.u32 %v474, 7
      %v476 = vsub.s32 0, %v475
      %v477 = vrot.slane %v472, %v476
      %v495 = vunpack.c.l.b16 %v456
      %v496 = vunpack.c.l.b16 %v457
      %v497 = vunpack.c.l.b16 %v458
      %v498 = vunpack.c.l.b16 %v459
      %v499 = vunpack.c.l.b16 %v460
      %v500 = vunpack.c.l.b16 %v461
      %v501 = vunpack.c.l.b16 %v462
      %v502 = vunpack.c.l.b16 %v463
      %v503 = vunpack.c.l.b16 %v464
      %v504 = vunpack.c.l.b16 %v465
      %v505 = vunpack.c.l.b16 %v466
      %v506 = vunpack.c.l.b16 %v467
      %v507 = vunpack.c.l.b16 %v468
      %v508 = vunpack.c.l.b16 %v469
      %v509 = vunpack.c.l.b16 %v470
      %v510 = vunpack.c.l.b16 %v471
      %v511 = vpack.c.b16 %v496, %v495
      %v512 = vpack.c.b16 %v498, %v497
      %v513 = vpack.c.b16 %v500, %v499
      %v514 = vpack.c.b16 %v502, %v501
      %v515 = vpack.c.b16 %v504, %v503
      %v516 = vpack.c.b16 %v506, %v505
      %v517 = vpack.c.b16 %v508, %v507
      %v518 = vpack.c.b16 %v510, %v509
      %527 = vmatprep.subr.bf16.mxu0 0
      %528 = vmatpush1.bf16.msra.mxu0 %v511
      %529 = vmatprep.subr.bf16.mxu0 0
      %530 = vmatpush1.bf16.msra.mxu0 %v512
      %531 = vmatprep.subr.bf16.mxu0 0
      %532 = vmatpush1.bf16.msra.mxu0 %v513
      %533 = vmatprep.subr.bf16.mxu0 0
      %534 = vmatpush1.bf16.msra.mxu0 %v514
      %535 = vmatprep.subr.bf16.mxu0 0
      %536 = vmatpush1.bf16.msra.mxu0 %v515
      %537 = vmatprep.subr.bf16.mxu0 0
      %538 = vmatpush1.bf16.msra.mxu0 %v516
      %539 = vmatprep.subr.bf16.mxu0 0
      %540 = vmatpush1.bf16.msra.mxu0 %v517
      %541 = vmatprep.subr.bf16.mxu0 0
      %542 = vmatpush1.bf16.msra.mxu0 %v518
      %543 = vmatprep.subr.bf16.mxu0 0
      %544 = vmatpush1.bf16.msra.mxu0 0
      %545 = vmatprep.subr.bf16.mxu0 0
      %546 = vmatpush1.bf16.msra.mxu0 0
      %547 = vmatprep.subr.bf16.mxu0 0
      %548 = vmatpush1.bf16.msra.mxu0 0
      %549 = vmatprep.subr.bf16.mxu0 0
      %550 = vmatpush1.bf16.msra.mxu0 0
      %551 = vmatprep.subr.bf16.mxu0 0
      %552 = vmatpush1.bf16.msra.mxu0 0
      %553 = vmatprep.subr.bf16.mxu0 0
      %554 = vmatpush1.bf16.msra.mxu0 0
      %555 = vmatprep.subr.bf16.mxu0 0
      %556 = vmatpush1.bf16.msra.mxu0 0
      %557 = vmatprep.subr.bf16.mxu0 0
      %558 = vmatpush1.bf16.msra.mxu0 0
      %559 = vmatprep.mubr.bf16.mxu0 0
      %560 = vmatmul.mubr.bf16.gmra.mrb[0].mxu0 %v455
      %v561 = vpop.f32.mrb[0].mxu0
      %v562 = vadd.f32 %v477, %v561
      %v563 = vpop.f32.mrb[0].mxu0
      %v564 = vpop.f32.mrb[0].mxu0
      %v565 = vadd.f32 %v477, %v564
      %v566 = vpop.f32.mrb[0].mxu0
      %567 = vdwg.mxu0
      %v568 = vmax.f32 %v562, 0.0
      %v569 = vmax.f32 %v565, 0.0
      %570 = vst [vmem:[#allocation2] sm:$0xff] %v568
      %571 = vst [vmem:[#allocation2 + $0x8] sm:$0xff] %v569
      %v572 = vld [vmem:[#allocation2] sm:$0xff]
      %v573 = vld [vmem:[#allocation2 + $0x8] sm:$0xff]
      %v574 = vadd.f32 %v572, %v573
      %v575 = vrot.slane %v574, 4
      %v576 = vadd.f32 %v574, %v575
      %v577 = vrot.slane %v576, 2
      %v578 = vadd.f32 %v576, %v577
      %v579 = vrot.slane %v578, 1
      %v580 = vadd.f32 %v578, %v579
      %s581 = scalar_lea.vmem %s295, 128
      %v582 = vld [vmem:[%s581] sm:$0xff]
      %v583 = vld [vmem:[%s581 + $0x8] sm:$0xff]
      %v584 = vld [vmem:[%s581 + $0x10] sm:$0xff]
      %v585 = vld [vmem:[%s581 + $0x18] sm:$0xff]
      %v586 = vld [vmem:[%s581 + $0x20] sm:$0xff]
      %v587 = vld [vmem:[%s581 + $0x28] sm:$0xff]
      %v588 = vld [vmem:[%s581 + $0x30] sm:$0xff]
      %v589 = vld [vmem:[%s581 + $0x38] sm:$0xff]
      %v590 = vld [vmem:[%s581 + $0x40] sm:$0xff]
      %v591 = vld [vmem:[%s581 + $0x48] sm:$0xff]
      %v592 = vld [vmem:[%s581 + $0x50] sm:$0xff]
      %v593 = vld [vmem:[%s581 + $0x58] sm:$0xff]
      %v594 = vld [vmem:[%s581 + $0x60] sm:$0xff]
      %v595 = vld [vmem:[%s581 + $0x68] sm:$0xff]
      %v596 = vld [vmem:[%s581 + $0x70] sm:$0xff]
      %v597 = vld [vmem:[%s581 + $0x78] sm:$0xff]
      %s598 = scalar_lea.vmem %s299, 1
      %v599 = vld [vmem:[%s598] sm:$0x1]
      %v600 = vmul.f32 %v599, 16.0
      %601 = vmatprep.subr.mxu0 0.0
      %602 = vmatpush1.msra.mxu0 %v582
      %603 = vmatprep.subr.mxu0 0.0
      %604 = vmatpush1.msra.mxu0 %v583
      %605 = vmatprep.subr.mxu0 0.0
      %606 = vmatpush1.msra.mxu0 %v584
      %607 = vmatprep.subr.mxu0 0.0
      %608 = vmatpush1.msra.mxu0 %v585
      %609 = vmatprep.subr.mxu0 0.0
      %610 = vmatpush1.msra.mxu0 %v586
      %611 = vmatprep.subr.mxu0 0.0
      %612 = vmatpush1.msra.mxu0 %v587
      %613 = vmatprep.subr.mxu0 0.0
      %614 = vmatpush1.msra.mxu0 %v588
      %615 = vmatprep.subr.mxu0 0.0
      %616 = vmatpush1.msra.mxu0 %v589
      %617 = vmatprep.subr.mxu0 0.0
      %618 = vmatpush1.msra.mxu0 %v590
      %619 = vmatprep.subr.mxu0 0.0
      %620 = vmatpush1.msra.mxu0 %v591
      %621 = vmatprep.subr.mxu0 0.0
      %622 = vmatpush1.msra.mxu0 %v592
      %623 = vmatprep.subr.mxu0 0.0
      %624 = vmatpush1.msra.mxu0 %v593
      %625 = vmatprep.subr.mxu0 0.0
      %626 = vmatpush1.msra.mxu0 %v594
      %627 = vmatprep.subr.mxu0 0.0
      %628 = vmatpush1.msra.mxu0 %v595
      %629 = vmatprep.subr.mxu0 0.0
      %630 = vmatpush1.msra.mxu0 %v596
      %631 = vmatprep.subr.mxu0 0.0
      %632 = vmatpush1.msra.mxu0 %v597
      %633 = vmatprep.subr.mxu0 0.0
      %634 = vmatpush1.msra.mxu0 0.0
      %635 = vmatprep.subr.mxu0 0.0
      %636 = vmatpush1.msra.mxu0 0.0
      %637 = vmatprep.subr.mxu0 0.0
      %638 = vmatpush1.msra.mxu0 0.0
      %639 = vmatprep.subr.mxu0 0.0
      %640 = vmatpush1.msra.mxu0 0.0
      %641 = vmatprep.subr.mxu0 0.0
      %642 = vmatpush1.msra.mxu0 0.0
      %643 = vmatprep.subr.mxu0 0.0
      %644 = vmatpush1.msra.mxu0 0.0
      %645 = vmatprep.subr.mxu0 0.0
      %646 = vmatpush1.msra.mxu0 0.0
      %647 = vmatprep.subr.mxu0 0.0
      %648 = vmatpush1.msra.mxu0 0.0
      %649 = vmatprep.subr.mxu0 0.0
      %650 = vmatpush1.msra.mxu0 0.0
      %651 = vmatprep.subr.mxu0 0.0
      %652 = vmatpush1.msra.mxu0 0.0
      %653 = vmatprep.subr.mxu0 0.0
      %654 = vmatpush1.msra.mxu0 0.0
      %655 = vmatprep.subr.mxu0 0.0
      %656 = vmatpush1.msra.mxu0 0.0
      %657 = vmatprep.subr.mxu0 0.0
      %658 = vmatpush1.msra.mxu0 0.0
      %659 = vmatprep.subr.mxu0 0.0
      %660 = vmatpush1.msra.mxu0 0.0
      %661 = vmatprep.subr.mxu0 0.0
      %662 = vmatpush1.msra.mxu0 0.0
      %663 = vmatprep.subr.mxu0 0.0
      %664 = vmatpush1.msra.mxu0 0.0
      %665 = vmatprep.mubr.f32.mxu0 0.0
      %666 = vmatmul.mubr.f32.gmra.mrb[0].mxu0 %v580
      %v667 = vpop.f32.mrb[0].mxu0
      %v668 = vadd.f32 %v600, %v667
      %v669 = vpop.f32.mrb[0].mxu0
      %670 = vdwg.mxu0
      %v671 = vadd.f32 %v399, %v668
      %v672 = vpack.c.bf16 %v573, %v572
      %v673 = vld [vmem:[%s0] sm:$0xf]
      %v674 = vld [vmem:[%s0 + $0x4] sm:$0xf]
      %v677 = vunpack.c.l.b16 %v673
      %v678 = vunpack.c.l.b16 %v674
      %v679 = vpack.c.b16 %v678, %v677
      %v681 = vsel %vm410, %v679, 0
      %683 = vmatprep.subr.bf16.mxu0 0
      %684 = vmatpush1.bf16.msra.mxu0 %v672
      %685 = vmatprep.subr.bf16.mxu0 0
      %686 = vmatpush1.bf16.msra.mxu0 0
      %687 = vmatprep.subr.bf16.mxu0 0
      %688 = vmatpush1.bf16.msra.mxu0 0
      %689 = vmatprep.subr.bf16.mxu0 0
      %690 = vmatpush1.bf16.msra.mxu0 0
      %691 = vmatprep.subr.bf16.mxu0 0
      %692 = vmatpush1.bf16.msra.mxu0 0
      %693 = vmatprep.subr.bf16.mxu0 0
      %694 = vmatpush1.bf16.msra.mxu0 0
      %695 = vmatprep.subr.bf16.mxu0 0
      %696 = vmatpush1.bf16.msra.mxu0 0
      %697 = vmatprep.subr.bf16.mxu0 0
      %698 = vmatpush1.bf16.msra.mxu0 0
      %699 = vmatprep.subr.bf16.mxu0 0
      %700 = vmatpush1.bf16.msra.mxu0 0
      %701 = vmatprep.subr.bf16.mxu0 0
      %702 = vmatpush1.bf16.msra.mxu0 0
      %703 = vmatprep.subr.bf16.mxu0 0
      %704 = vmatpush1.bf16.msra.mxu0 0
      %705 = vmatprep.subr.bf16.mxu0 0
      %706 = vmatpush1.bf16.msra.mxu0 0
      %707 = vmatprep.subr.bf16.mxu0 0
      %708 = vmatpush1.bf16.msra.mxu0 0
      %709 = vmatprep.subr.bf16.mxu0 0
      %710 = vmatpush1.bf16.msra.mxu0 0
      %711 = vmatprep.subr.bf16.mxu0 0
      %712 = vmatpush1.bf16.msra.mxu0 0
      %713 = vmatprep.subr.bf16.mxu0 0
      %714 = vmatpush1.bf16.msra.mxu0 0
      %715 = vmatprep.mubr.bf16.mxu0 0
      %716 = vmatmul.mubr.bf16.gmra.mrb[0].mxu0 %v681
      %v717 = vpop.f32.mrb[0].mxu0
      %v718 = vadd.f32 0.0, %v717
      %v719 = vpop.f32.mrb[0].mxu0
      %v720 = vpop.f32.mrb[0].mxu0
      %v721 = vadd.f32 0.0, %v720
      %v722 = vpop.f32.mrb[0].mxu0
      %723 = vdwg.mxu0
      %v724 = vpack.c.bf16 %v721, %v718
      %s725 = scalar_lea.vmem %s286, 64
      %v726 = vld [vmem:[%s725] sm:$0xf]
      %v727 = vld [vmem:[%s725 + $0x4] sm:$0xf]
      %v728 = vld [vmem:[%s725 + $0x8] sm:$0xf]
      %v729 = vld [vmem:[%s725 + $0xc] sm:$0xf]
      %v730 = vld [vmem:[%s725 + $0x10] sm:$0xf]
      %v731 = vld [vmem:[%s725 + $0x14] sm:$0xf]
      %v732 = vld [vmem:[%s725 + $0x18] sm:$0xf]
      %v733 = vld [vmem:[%s725 + $0x1c] sm:$0xf]
      %v734 = vld [vmem:[%s725 + $0x20] sm:$0xf]
      %v735 = vld [vmem:[%s725 + $0x24] sm:$0xf]
      %v736 = vld [vmem:[%s725 + $0x28] sm:$0xf]
      %v737 = vld [vmem:[%s725 + $0x2c] sm:$0xf]
      %v738 = vld [vmem:[%s725 + $0x30] sm:$0xf]
      %v739 = vld [vmem:[%s725 + $0x34] sm:$0xf]
      %v740 = vld [vmem:[%s725 + $0x38] sm:$0xf]
      %v741 = vld [vmem:[%s725 + $0x3c] sm:$0xf]
      %s742 = scalar_lea.vmem %s290, 1
      %v743 = vld [vmem:[%s742] sm:$0x1]
      %v745 = vlaneseq
      %v746 = vshrl.u32 %v745, 7
      %v747 = vsub.s32 0, %v746
      %v748 = vrot.slane %v743, %v747
      %v766 = vunpack.c.l.b16 %v726
      %v767 = vunpack.c.l.b16 %v727
      %v768 = vunpack.c.l.b16 %v728
      %v769 = vunpack.c.l.b16 %v729
      %v770 = vunpack.c.l.b16 %v730
      %v771 = vunpack.c.l.b16 %v731
      %v772 = vunpack.c.l.b16 %v732
      %v773 = vunpack.c.l.b16 %v733
      %v774 = vunpack.c.l.b16 %v734
      %v775 = vunpack.c.l.b16 %v735
      %v776 = vunpack.c.l.b16 %v736
      %v777 = vunpack.c.l.b16 %v737
      %v778 = vunpack.c.l.b16 %v738
      %v779 = vunpack.c.l.b16 %v739
      %v780 = vunpack.c.l.b16 %v740
      %v781 = vunpack.c.l.b16 %v741
      %v782 = vpack.c.b16 %v767, %v766
      %v783 = vpack.c.b16 %v769, %v768
      %v784 = vpack.c.b16 %v771, %v770
      %v785 = vpack.c.b16 %v773, %v772
      %v786 = vpack.c.b16 %v775, %v774
      %v787 = vpack.c.b16 %v777, %v776
      %v788 = vpack.c.b16 %v779, %v778
      %v789 = vpack.c.b16 %v781, %v780
      %798 = vmatprep.subr.bf16.mxu0 0
      %799 = vmatpush1.bf16.msra.mxu0 %v782
      %800 = vmatprep.subr.bf16.mxu0 0
      %801 = vmatpush1.bf16.msra.mxu0 %v783
      %802 = vmatprep.subr.bf16.mxu0 0
      %803 = vmatpush1.bf16.msra.mxu0 %v784
      %804 = vmatprep.subr.bf16.mxu0 0
      %805 = vmatpush1.bf16.msra.mxu0 %v785
      %806 = vmatprep.subr.bf16.mxu0 0
      %807 = vmatpush1.bf16.msra.mxu0 %v786
      %808 = vmatprep.subr.bf16.mxu0 0
      %809 = vmatpush1.bf16.msra.mxu0 %v787
      %810 = vmatprep.subr.bf16.mxu0 0
      %811 = vmatpush1.bf16.msra.mxu0 %v788
      %812 = vmatprep.subr.bf16.mxu0 0
      %813 = vmatpush1.bf16.msra.mxu0 %v789
      %814 = vmatprep.subr.bf16.mxu0 0
      %815 = vmatpush1.bf16.msra.mxu0 0
      %816 = vmatprep.subr.bf16.mxu0 0
      %817 = vmatpush1.bf16.msra.mxu0 0
      %818 = vmatprep.subr.bf16.mxu0 0
      %819 = vmatpush1.bf16.msra.mxu0 0
      %820 = vmatprep.subr.bf16.mxu0 0
      %821 = vmatpush1.bf16.msra.mxu0 0
      %822 = vmatprep.subr.bf16.mxu0 0
      %823 = vmatpush1.bf16.msra.mxu0 0
      %824 = vmatprep.subr.bf16.mxu0 0
      %825 = vmatpush1.bf16.msra.mxu0 0
      %826 = vmatprep.subr.bf16.mxu0 0
      %827 = vmatpush1.bf16.msra.mxu0 0
      %828 = vmatprep.subr.bf16.mxu0 0
      %829 = vmatpush1.bf16.msra.mxu0 0
      %830 = vmatprep.mubr.bf16.mxu0 0
      %831 = vmatmul.mubr.bf16.gmra.mrb[0].mxu0 %v724
      %v832 = vpop.f32.mrb[0].mxu0
      %v833 = vadd.f32 %v748, %v832
      %v834 = vpop.f32.mrb[0].mxu0
      %v835 = vpop.f32.mrb[0].mxu0
      %v836 = vadd.f32 %v748, %v835
      %v837 = vpop.f32.mrb[0].mxu0
      %838 = vdwg.mxu0
      %v839 = vmax.f32 %v833, 0.0
      %v840 = vmax.f32 %v836, 0.0
      %841 = vst [vmem:[#allocation2] sm:$0xff] %v839
      %842 = vst [vmem:[#allocation2 + $0x8] sm:$0xff] %v840
      %v843 = vld [vmem:[#allocation2] sm:$0xff]
      %v844 = vld [vmem:[#allocation2 + $0x8] sm:$0xff]
      %v845 = vadd.f32 %v843, %v844
      %v846 = vrot.slane %v845, 4
      %v847 = vadd.f32 %v845, %v846
      %v848 = vrot.slane %v847, 2
      %v849 = vadd.f32 %v847, %v848
      %v850 = vrot.slane %v849, 1
      %v851 = vadd.f32 %v849, %v850
      %s852 = scalar_lea.vmem %s295, 256
      %v853 = vld [vmem:[%s852] sm:$0xff]
      %v854 = vld [vmem:[%s852 + $0x8] sm:$0xff]
      %v855 = vld [vmem:[%s852 + $0x10] sm:$0xff]
      %v856 = vld [vmem:[%s852 + $0x18] sm:$0xff]
      %v857 = vld [vmem:[%s852 + $0x20] sm:$0xff]
      %v858 = vld [vmem:[%s852 + $0x28] sm:$0xff]
      %v859 = vld [vmem:[%s852 + $0x30] sm:$0xff]
      %v860 = vld [vmem:[%s852 + $0x38] sm:$0xff]
      %v861 = vld [vmem:[%s852 + $0x40] sm:$0xff]
      %v862 = vld [vmem:[%s852 + $0x48] sm:$0xff]
      %v863 = vld [vmem:[%s852 + $0x50] sm:$0xff]
      %v864 = vld [vmem:[%s852 + $0x58] sm:$0xff]
      %v865 = vld [vmem:[%s852 + $0x60] sm:$0xff]
      %v866 = vld [vmem:[%s852 + $0x68] sm:$0xff]
      %v867 = vld [vmem:[%s852 + $0x70] sm:$0xff]
      %v868 = vld [vmem:[%s852 + $0x78] sm:$0xff]
      %s869 = scalar_lea.vmem %s299, 2
      %v870 = vld [vmem:[%s869] sm:$0x1]
      %v871 = vmul.f32 %v870, 16.0
      %872 = vmatprep.subr.mxu0 0.0
      %873 = vmatpush1.msra.mxu0 %v853
      %874 = vmatprep.subr.mxu0 0.0
      %875 = vmatpush1.msra.mxu0 %v854
      %876 = vmatprep.subr.mxu0 0.0
      %877 = vmatpush1.msra.mxu0 %v855
      %878 = vmatprep.subr.mxu0 0.0
      %879 = vmatpush1.msra.mxu0 %v856
      %880 = vmatprep.subr.mxu0 0.0
      %881 = vmatpush1.msra.mxu0 %v857
      %882 = vmatprep.subr.mxu0 0.0
      %883 = vmatpush1.msra.mxu0 %v858
      %884 = vmatprep.subr.mxu0 0.0
      %885 = vmatpush1.msra.mxu0 %v859
      %886 = vmatprep.subr.mxu0 0.0
      %887 = vmatpush1.msra.mxu0 %v860
      %888 = vmatprep.subr.mxu0 0.0
      %889 = vmatpush1.msra.mxu0 %v861
      %890 = vmatprep.subr.mxu0 0.0
      %891 = vmatpush1.msra.mxu0 %v862
      %892 = vmatprep.subr.mxu0 0.0
      %893 = vmatpush1.msra.mxu0 %v863
      %894 = vmatprep.subr.mxu0 0.0
      %895 = vmatpush1.msra.mxu0 %v864
      %896 = vmatprep.subr.mxu0 0.0
      %897 = vmatpush1.msra.mxu0 %v865
      %898 = vmatprep.subr.mxu0 0.0
      %899 = vmatpush1.msra.mxu0 %v866
      %900 = vmatprep.subr.mxu0 0.0
      %901 = vmatpush1.msra.mxu0 %v867
      %902 = vmatprep.subr.mxu0 0.0
      %903 = vmatpush1.msra.mxu0 %v868
      %904 = vmatprep.subr.mxu0 0.0
      %905 = vmatpush1.msra.mxu0 0.0
      %906 = vmatprep.subr.mxu0 0.0
      %907 = vmatpush1.msra.mxu0 0.0
      %908 = vmatprep.subr.mxu0 0.0
      %909 = vmatpush1.msra.mxu0 0.0
      %910 = vmatprep.subr.mxu0 0.0
      %911 = vmatpush1.msra.mxu0 0.0
      %912 = vmatprep.subr.mxu0 0.0
      %913 = vmatpush1.msra.mxu0 0.0
      %914 = vmatprep.subr.mxu0 0.0
      %915 = vmatpush1.msra.mxu0 0.0
      %916 = vmatprep.subr.mxu0 0.0
      %917 = vmatpush1.msra.mxu0 0.0
      %918 = vmatprep.subr.mxu0 0.0
      %919 = vmatpush1.msra.mxu0 0.0
      %920 = vmatprep.subr.mxu0 0.0
      %921 = vmatpush1.msra.mxu0 0.0
      %922 = vmatprep.subr.mxu0 0.0
      %923 = vmatpush1.msra.mxu0 0.0
      %924 = vmatprep.subr.mxu0 0.0
      %925 = vmatpush1.msra.mxu0 0.0
      %926 = vmatprep.subr.mxu0 0.0
      %927 = vmatpush1.msra.mxu0 0.0
      %928 = vmatprep.subr.mxu0 0.0
      %929 = vmatpush1.msra.mxu0 0.0
      %930 = vmatprep.subr.mxu0 0.0
      %931 = vmatpush1.msra.mxu0 0.0
      %932 = vmatprep.subr.mxu0 0.0
      %933 = vmatpush1.msra.mxu0 0.0
      %934 = vmatprep.subr.mxu0 0.0
      %935 = vmatpush1.msra.mxu0 0.0
      %936 = vmatprep.mubr.f32.mxu0 0.0
      %937 = vmatmul.mubr.f32.gmra.mrb[0].mxu0 %v851
      %v938 = vpop.f32.mrb[0].mxu0
      %v939 = vadd.f32 %v871, %v938
      %v940 = vpop.f32.mrb[0].mxu0
      %941 = vdwg.mxu0
      %v942 = vadd.f32 %v671, %v939
      %v943 = vmul.f32 %v942, 0.020833334
      %v944 = vlaneseq
      %v945 = vshrl.u32 %v944, 7
      %v946 = vsub.s32 0, %v945
      %v947 = vrot.slane %v943, %v946
      %948 = vst [vmem:[%s303] sm:$0xff] %v947
      %p949 = scmp.lt.s32.totalorder %s17, 1
      %s950 = scalar_select %p949, %s17, 1
      %s951 = smul.addr %s950, 8
      %s952 = scalar_lea.vmem %s6, %s951
      // Predicated region
      $region45: #{bgcn_forward.1} parent=43 // pred_check
        %p953 = pneg %p181
      $region46: #{bgcn_forward.1} parent=43 // pred_check_branch
        %955 = sbr.rel (%p953) target = $region48
      $region47: #{bgcn_forward.1} parent=43 // pred_region
        _
      $region48: #{bgcn_forward.1} parent=43 // pred_fallthru
        _
    $region44: #{bgcn_forward.1} parent=5 // pred_fallthru
      _
    %p956 = scmp.le.s32.totalorder 2, %s12
    // Predicated region
    $region49: #{bgcn_forward.1} parent=5 // pred_check
      %p957 = pneg %p956
    $region50: #{bgcn_forward.1} parent=5 // pred_check_branch
      %959 = sbr.rel (%p957) target = $region52
    $region51: #{bgcn_forward.1} parent=5 // pred_region
      %s960 = ssub.s32 %s12, 2
      // Predicated region
      $region53: #{bgcn_forward.1} parent=51 // pred_check
        %p961 = pneg %p187
      $region54: #{bgcn_forward.1} parent=51 // pred_check_branch
        %963 = sbr.rel (%p961) target = $region56
      $region55: #{bgcn_forward.1} parent=51 // pred_region
        %p964 = scmp.lt.s32.totalorder %s18, 1
        %s965 = scalar_select %p964, %s18, 1
        %s966 = smul.addr %s965, 8
        %s967 = scalar_lea.vmem %s6, %s966
      $region56: #{bgcn_forward.1} parent=51 // pred_fallthru
        _
    $region52: #{bgcn_forward.1} parent=5 // pred_fallthru
      _
  $region6: #{bgcn_forward.1} parent=0 // loop_footer
    %s16 = sadd.s32 1, %s12
  $region7: #{bgcn_forward.1} parent=0 // loop_footer_branch
    %11 = sbr.rel target = $region3
  $region8: #{bgcn_forward.1} parent=0 // loop_exit
    _

</llo_original>
